<compile_context>
chip_gen: v7x
topology: tpu7x:2x2x1
jax: 0.10.0
libtpu: 0.0.40
codegen_flags: <defaults>
</compile_context>

<pallas_src>
import math

import jax
import jax.numpy as jnp
from jax.experimental import pallas as pl
from jax.experimental.pallas import tpu as pltpu


def _round_up(n, m):
    return ((n + m - 1) // m) * m


def _pick_batch_tile(B, batch_tile):
    if batch_tile is None:
        # Sized for per-grid-step overhead amortization and to keep >= 2 tiles
        # when B is large (v7x has two TensorCores fed by the "parallel" axis).
        # VMEM never constrains this kernel on any generation.
        batch_tile = min(4096, _round_up(pl.cdiv(B, 2), 256))
    tb = int(batch_tile)
    if tb >= B:
        return B                      # one full-extent tile (always a legal block)
    return _round_up(tb, 128)         # lane-aligned; Pallas masks the boundary tile


def _qfunc_kernel(x_ref, w1_ref, b1_ref, w2_ref, b2_ref, w3_ref, b3_ref, o_ref):
    """Whole MLP for one batch tile, computed transposed (batch on lanes).

    x_ref : (D_in, tb) bf16   -- x^T tile
    w1_ref: (H1, D_in) bf16   b1_ref: (H1, 1) f32
    w2_ref: (H2, H1)   bf16   b2_ref: (H2, 1) f32
    w3_ref: (1,  H2)   bf16   b3_ref: (1, 1)  f32 scalar in SMEM
    o_ref : (1,  tb)   f32    lane-dense sigmoid(q)^T row
    """
    x = x_ref[...]

    # layer 1: h1^T = relu(W1 @ x^T + b1)            (H1, tb), MXU N = tb (dense)
    h1 = jnp.dot(w1_ref[...], x, preferred_element_type=jnp.float32)
    h1 = jnp.maximum(h1 + b1_ref[...], 0.0).astype(jnp.bfloat16)

    # layer 2: h2^T = relu(W2 @ h1^T + b2)           (H2, tb)
    h2 = jnp.dot(w2_ref[...], h1, preferred_element_type=jnp.float32)
    h2 = jnp.maximum(h2 + b2_ref[...], 0.0).astype(jnp.bfloat16)

    # output: z^T = W3 @ h2^T + b3                   (1, tb)
    z = jnp.dot(w3_ref[...], h2, preferred_element_type=jnp.float32) + b3_ref[0, 0]

    # Sigmoid (numerically clamped); exp + approx reciprocal both ride the EUP.
    z = jnp.clip(z, -30.0, 30.0)
    o_ref[...] = pl.reciprocal(1.0 + jnp.exp(-z), approx=True)


def mlp_q_forward(sta, act, params, *, batch_tile=None):
    """Pallas-backed forward of MLPQFunction.

    sta: (B, sta_dim) f32, act: (B, act_dim) f32
    params: dict with w1,b1,w2,b2,w3,b3 in PyTorch layout (out, in) / (out,)
    returns: (B,) f32
    """
    B = sta.shape[0]

    # glue: torch.cat + transpose so batch lands on the lane axis (single fused
    # relayout/cast pass over the small feature dim).  No jnp.pad is needed.
    xT = jnp.concatenate([sta, act], axis=-1).T.astype(jnp.bfloat16)   # (D_in, B)
    D_in = xT.shape[0]

    # PyTorch-layout weights travel as-is (no .T glue).  bf16 feeds the MXU;
    # biases stay f32 so all in-kernel elementwise math is f32 (v5e-friendly).
    w1 = params["w1"].astype(jnp.bfloat16)               # (H1, D_in)
    w2 = params["w2"].astype(jnp.bfloat16)               # (H2, H1)
    w3 = params["w3"].astype(jnp.bfloat16)               # (1,  H2)
    b1 = params["b1"].reshape(-1, 1).astype(jnp.float32)  # (H1, 1)
    b2 = params["b2"].reshape(-1, 1).astype(jnp.float32)  # (H2, 1)
    b3 = params["b3"].reshape(1, 1).astype(jnp.float32)   # scalar -> SMEM
    H1, H2 = w1.shape[0], w2.shape[0]

    tb = _pick_batch_tile(B, batch_tile)
    num_tiles = pl.cdiv(B, tb)

    # Roofline hint for XLA scheduling (kernel is MXU-issue/step-overhead bound).
    flops = 2 * B * (D_in * H1 + H1 * H2 + H2)
    bytes_accessed = (B * (2 * D_in + 4)
                      + 2 * (D_in * H1 + H1 * H2 + H2)
                      + 4 * (H1 + H2 + 1))

    out = pl.pallas_call(
        _qfunc_kernel,
        out_shape=jax.ShapeDtypeStruct((1, B), jnp.float32),
        grid=(num_tiles,),
        in_specs=[
            pl.BlockSpec((D_in, tb), lambda i: (0, i)),          # x^T tile
            pl.BlockSpec((H1, D_in), lambda i: (0, 0)),          # w1 (resident)
            pl.BlockSpec((H1, 1),    lambda i: (0, 0)),          # b1 column
            pl.BlockSpec((H2, H1),   lambda i: (0, 0)),          # w2
            pl.BlockSpec((H2, 1),    lambda i: (0, 0)),          # b2 column
            pl.BlockSpec((1, H2),    lambda i: (0, 0)),          # w3 row
            pl.BlockSpec(memory_space=pltpu.MemorySpace.SMEM),   # b3 scalar
        ],
        out_specs=pl.BlockSpec((1, tb), lambda i: (0, i)),       # lane-dense row
        compiler_params=pltpu.CompilerParams(
            dimension_semantics=("parallel",)),
        cost_estimate=pl.CostEstimate(
            flops=flops, transcendentals=B, bytes_accessed=bytes_accessed),
    )(xT, w1, b1, w2, b2, w3, b3)

    # glue: (1, B) -> (B,)  (torch.squeeze(q, -1))
    return out[0]


def init_params(key, sta_dim, act_dim, hidden_sizes):
    """Deterministic init mirroring the module: Xavier-uniform weights (gain=1),
    PyTorch-default uniform biases."""
    sizes = [sta_dim + act_dim] + list(hidden_sizes) + [1]
    params = {}
    for j in range(len(sizes) - 1):
        fan_in, fan_out = sizes[j], sizes[j + 1]
        key, kw, kb = jax.random.split(key, 3)
        w_bound = math.sqrt(6.0 / (fan_in + fan_out))   # xavier_uniform_, gain=1
        b_bound = 1.0 / math.sqrt(fan_in)               # nn.Linear default bias
        params[f"w{j+1}"] = jax.random.uniform(
            kw, (fan_out, fan_in), jnp.float32, -w_bound, w_bound)
        params[f"b{j+1}"] = jax.random.uniform(
            kb, (fan_out,), jnp.float32, -b_bound, b_bound)
    return params


def _reference_forward(sta, act, params):
    """Pure-JAX f32 reference for correctness check."""
    x = jnp.concatenate([sta, act], axis=-1)
    h = jnp.maximum(x @ params["w1"].T + params["b1"], 0.0)
    h = jnp.maximum(h @ params["w2"].T + params["b2"], 0.0)
    z = h @ params["w3"].T + params["b3"]
    return jnp.squeeze(jax.nn.sigmoid(z), axis=-1)


if __name__ == "__main__":
    B, STA_DIM, ACT_DIM = 8, 8, 8
    HIDDEN = (32, 32)

    key = jax.random.PRNGKey(0)
    key, k_sta, k_act, k_par = jax.random.split(key, 4)

    sta = jax.random.normal(k_sta, (B, STA_DIM), jnp.float32)
    act = jax.random.normal(k_act, (B, ACT_DIM), jnp.float32)
    params = init_params(k_par, STA_DIM, ACT_DIM, HIDDEN)

    # Small-B path: single full-extent tile.
    q = jax.block_until_ready(mlp_q_forward(sta, act, params))
    q_ref = _reference_forward(sta, act, params)
    assert q.shape == (B,), q.shape
    # bf16 inputs/weights + approx reciprocal => loosened tolerance vs f32 ref.
    assert jnp.allclose(q, q_ref, atol=2e-2, rtol=2e-2), (q, q_ref)

    # Multi-tile grid with a masked partial boundary tile (no jnp.pad path),
    # default heuristic (tb=256 -> 2 tiles) and explicit batch_tile (3 tiles).
    B2 = 300
    key, k_sta2, k_act2 = jax.random.split(key, 3)
    sta2 = jax.random.normal(k_sta2, (B2, STA_DIM), jnp.float32)
    act2 = jax.random.normal(k_act2, (B2, ACT_DIM), jnp.float32)
    q2_ref = _reference_forward(sta2, act2, params)

    q2 = jax.block_until_ready(mlp_q_forward(sta2, act2, params))
    assert q2.shape == (B2,), q2.shape
    assert jnp.allclose(q2, q2_ref, atol=2e-2, rtol=2e-2), (q2, q2_ref)

    q3 = jax.block_until_ready(mlp_q_forward(sta2, act2, params, batch_tile=128))
    assert q3.shape == (B2,), q3.shape
    assert jnp.allclose(q3, q2_ref, atol=2e-2, rtol=2e-2), (q3, q2_ref)

    print("KERNEL_OK")
</pallas_src>

<mosaic_0001>
module attributes {stable_mosaic.version = 11 : i64} {
  func.func @_qfunc_kernel(%arg0: i32, %arg1: memref<16x8xbf16, #tpu.memory_space<vmem>>, %arg2: memref<32x16xbf16, #tpu.memory_space<vmem>>, %arg3: memref<32x1xf32, #tpu.memory_space<vmem>>, %arg4: memref<32x32xbf16, #tpu.memory_space<vmem>>, %arg5: memref<32x1xf32, #tpu.memory_space<vmem>>, %arg6: memref<1x32xbf16, #tpu.memory_space<vmem>>, %arg7: memref<1x1xf32, #tpu.memory_space<smem>>, %arg8: memref<1x8xf32, #tpu.memory_space<vmem>>) attributes {dimension_semantics = [#tpu.dimension_semantics<parallel>], iteration_bounds = array<i64: 1>, scalar_prefetch = 0 : i64, scratch_operands = 0 : i64, tpu.core_type = #tpu.core_type<tc>, window_params = [{transform_indices = @transform_0, window_bounds = array<i64: 16, 8>}, {pipeline_mode = #tpu.pipeline_mode<synchronous>, transform_indices = @transform_1, window_bounds = array<i64: 32, 16>}, {pipeline_mode = #tpu.pipeline_mode<synchronous>, transform_indices = @transform_2, window_bounds = array<i64: 32, 1>}, {pipeline_mode = #tpu.pipeline_mode<synchronous>, transform_indices = @transform_3, window_bounds = array<i64: 32, 32>}, {pipeline_mode = #tpu.pipeline_mode<synchronous>, transform_indices = @transform_4, window_bounds = array<i64: 32, 1>}, {pipeline_mode = #tpu.pipeline_mode<synchronous>, transform_indices = @transform_5, window_bounds = array<i64: 1, 32>}, {transform_indices = @transform_6, window_bounds = array<i64: 1, 1>}, {transform_indices = @transform_7, window_bounds = array<i64: 1, 8>}]} {
    %c0 = arith.constant 0 : index
    %c0_0 = arith.constant 0 : index
    %0 = vector.load %arg1[%c0, %c0_0] : memref<16x8xbf16, #tpu.memory_space<vmem>>, vector<16x8xbf16>
    %c0_1 = arith.constant 0 : index
    %c0_2 = arith.constant 0 : index
    %1 = vector.load %arg2[%c0_1, %c0_2] : memref<32x16xbf16, #tpu.memory_space<vmem>>, vector<32x16xbf16>
    %cst = arith.constant dense<0.000000e+00> : vector<32x8xf32>
    %2 = tpu.matmul %1, %0, %cst {dimension_numbers = #tpu.dot_dimension_numbers<[1], [0], [0], [1], [0, 0, 1, 1], [], []>} : vector<32x16xbf16>, vector<16x8xbf16>, vector<32x8xf32> -> vector<32x8xf32>
    %c0_3 = arith.constant 0 : index
    %c0_4 = arith.constant 0 : index
    %3 = vector.load %arg3[%c0_3, %c0_4] : memref<32x1xf32, #tpu.memory_space<vmem>>, vector<32x1xf32>
    %4 = vector.broadcast %3 : vector<32x1xf32> to vector<32x8xf32>
    %5 = arith.addf %2, %4 : vector<32x8xf32>
    %cst_5 = arith.constant 0.000000e+00 : f32
    %6 = vector.broadcast %cst_5 : f32 to vector<32x8xf32>
    %7 = arith.maximumf %5, %6 : vector<32x8xf32>
    %8 = arith.truncf %7 : vector<32x8xf32> to vector<32x8xbf16>
    %c0_6 = arith.constant 0 : index
    %c0_7 = arith.constant 0 : index
    %9 = vector.load %arg4[%c0_6, %c0_7] : memref<32x32xbf16, #tpu.memory_space<vmem>>, vector<32x32xbf16>
    %cst_8 = arith.constant dense<0.000000e+00> : vector<32x8xf32>
    %10 = tpu.matmul %9, %8, %cst_8 {dimension_numbers = #tpu.dot_dimension_numbers<[1], [0], [0], [1], [0, 0, 1, 1], [], []>} : vector<32x32xbf16>, vector<32x8xbf16>, vector<32x8xf32> -> vector<32x8xf32>
    %c0_9 = arith.constant 0 : index
    %c0_10 = arith.constant 0 : index
    %11 = vector.load %arg5[%c0_9, %c0_10] : memref<32x1xf32, #tpu.memory_space<vmem>>, vector<32x1xf32>
    %12 = vector.broadcast %11 : vector<32x1xf32> to vector<32x8xf32>
    %13 = arith.addf %10, %12 : vector<32x8xf32>
    %cst_11 = arith.constant 0.000000e+00 : f32
    %14 = vector.broadcast %cst_11 : f32 to vector<32x8xf32>
    %15 = arith.maximumf %13, %14 : vector<32x8xf32>
    %16 = arith.truncf %15 : vector<32x8xf32> to vector<32x8xbf16>
    %c0_12 = arith.constant 0 : index
    %c0_13 = arith.constant 0 : index
    %17 = vector.load %arg6[%c0_12, %c0_13] : memref<1x32xbf16, #tpu.memory_space<vmem>>, vector<1x32xbf16>
    %cst_14 = arith.constant dense<0.000000e+00> : vector<1x8xf32>
    %18 = tpu.matmul %17, %16, %cst_14 {dimension_numbers = #tpu.dot_dimension_numbers<[1], [0], [0], [1], [0, 0, 1, 1], [], []>} : vector<1x32xbf16>, vector<32x8xbf16>, vector<1x8xf32> -> vector<1x8xf32>
    %c0_15 = arith.constant 0 : index
    %c0_16 = arith.constant 0 : index
    %19 = memref.load %arg7[%c0_15, %c0_16] : memref<1x1xf32, #tpu.memory_space<smem>>
    %20 = vector.broadcast %19 : f32 to vector<1x8xf32>
    %21 = arith.addf %18, %20 : vector<1x8xf32>
    %cst_17 = arith.constant -3.000000e+01 : f32
    %cst_18 = arith.constant 3.000000e+01 : f32
    %22 = vector.broadcast %cst_17 : f32 to vector<1x8xf32>
    %23 = arith.maximumf %22, %21 : vector<1x8xf32>
    %24 = vector.broadcast %cst_18 : f32 to vector<1x8xf32>
    %25 = arith.minimumf %24, %23 : vector<1x8xf32>
    %cst_19 = arith.constant 0.000000e+00 : f32
    %26 = vector.broadcast %cst_19 : f32 to vector<1x8xf32>
    %27 = arith.subf %26, %25 : vector<1x8xf32>
    %28 = math.exp %27 : vector<1x8xf32>
    %cst_20 = arith.constant 1.000000e+00 : f32
    %29 = vector.broadcast %cst_20 : f32 to vector<1x8xf32>
    %30 = arith.addf %29, %28 : vector<1x8xf32>
    %31 = tpu.reciprocal %30 {approx = true} : vector<1x8xf32> -> vector<1x8xf32>
    %c0_21 = arith.constant 0 : index
    %c0_22 = arith.constant 0 : index
    %32 = vector.load %arg8[%c0_21, %c0_22] : memref<1x8xf32, #tpu.memory_space<vmem>>, vector<1x8xf32>
    tpu.vector_store %arg8[%c0_21, %c0_22], %31 {strides = array<i32>} : memref<1x8xf32, #tpu.memory_space<vmem>>, vector<1x8xf32>,
    return
  }
  func.func @transform_0(%arg0: i32) -> (i32, i32) {
    %c0_i32 = arith.constant 0 : i32
    %c0_i32_0 = arith.constant 0 : i32
    return %c0_i32, %arg0 : i32, i32
  }
  func.func @transform_1(%arg0: i32) -> (i32, i32) {
    %c0_i32 = arith.constant 0 : i32
    %c0_i32_0 = arith.constant 0 : i32
    %c0_i32_1 = arith.constant 0 : i32
    return %c0_i32, %c0_i32_0 : i32, i32
  }
  func.func @transform_2(%arg0: i32) -> (i32, i32) {
    %c0_i32 = arith.constant 0 : i32
    %c0_i32_0 = arith.constant 0 : i32
    %c0_i32_1 = arith.constant 0 : i32
    return %c0_i32, %c0_i32_0 : i32, i32
  }
  func.func @transform_3(%arg0: i32) -> (i32, i32) {
    %c0_i32 = arith.constant 0 : i32
    %c0_i32_0 = arith.constant 0 : i32
    %c0_i32_1 = arith.constant 0 : i32
    return %c0_i32, %c0_i32_0 : i32, i32
  }
  func.func @transform_4(%arg0: i32) -> (i32, i32) {
    %c0_i32 = arith.constant 0 : i32
    %c0_i32_0 = arith.constant 0 : i32
    %c0_i32_1 = arith.constant 0 : i32
    return %c0_i32, %c0_i32_0 : i32, i32
  }
  func.func @transform_5(%arg0: i32) -> (i32, i32) {
    %c0_i32 = arith.constant 0 : i32
    %c0_i32_0 = arith.constant 0 : i32
    %c0_i32_1 = arith.constant 0 : i32
    return %c0_i32, %c0_i32_0 : i32, i32
  }
  func.func @transform_6(%arg0: i32) -> (i32, i32) {
    %c0_i32 = arith.constant 0 : i32
    %c0_i32_0 = arith.constant 0 : i32
    %c0_i32_1 = arith.constant 0 : i32
    return %c0_i32, %c0_i32_0 : i32, i32
  }
  func.func @transform_7(%arg0: i32) -> (i32, i32) {
    %c0_i32 = arith.constant 0 : i32
    %c0_i32_0 = arith.constant 0 : i32
    return %c0_i32, %arg0 : i32, i32
  }
}

</mosaic_0001>

<llo_original>
// kernel: tpu_custom_call.1
$region0: #{tpu_custom_call.1}
  #allocation0 [shape = 'u32[]', space=smem, size = 0x4, offset = 0x4, fixed_abs, tag = 'smem constant byte address 0x4 - core index']
  #allocation1 [shape = 'u32[144,128]{1,0:T(1,128)}', space=vmem, size = 0x12000, scoped, tag = 'internal scratch']
  #allocation2 [shape = 'f32[1,1]{1,0:T(1,128)S(6)}', space=smem, size = 0x200, scoped, tag = 'scoped memory for tpu_custom_call.1']
  %s0 = inlined_call_operand.vmem [shape: bf16[16,8], index: 0, kind: input, shape index: {}]
  %s1 = inlined_call_operand.vmem [shape: bf16[32,16], index: 1, kind: input, shape index: {}]
  %s2 = inlined_call_operand.vmem [shape: f32[32,1], index: 2, kind: input, shape index: {}]
  %s3 = inlined_call_operand.vmem [shape: bf16[32,32], index: 3, kind: input, shape index: {}]
  %s4 = inlined_call_operand.vmem [shape: f32[32,1], index: 4, kind: input, shape index: {}]
  %s5 = inlined_call_operand.vmem [shape: bf16[1,32], index: 5, kind: input, shape index: {}]
  %s6 = inlined_call_operand.<no memory space> [shape: f32[1,1], index: 6, kind: input, shape index: {}]
  %s7 = inlined_call_operand.hbm [shape: f32[1,8], index: 7, kind: output, shape index: {}]
  %s8 = sld [smem:[#allocation0]]
  $region38: #{tpu_custom_call.1} parent=0
    _
  %s10 = ssub.s32 1, %s8
  %s11 = scalar_select 0, %s10, %s8
  %12 = sst [smem:[#allocation2]] %s6
  $region1: #{tpu_custom_call.1} parent=0
    #allocation3 [shape = 'u8[512]{0}', space=vmem, size = 0x400, scoped, tag = 'output window, operand 0, single buffered']
    #allocation4 [shape = 's32[1]{0}', space=sflag, size = 0x4, scoped, tag = 'scoped memory for tpu_custom_call.1']
    %13 = vsyncpa [#allocation4], 0
    // Predicated region
    $region2: #{tpu_custom_call.1} parent=1 // pred_check
      _
    $region3: #{tpu_custom_call.1} parent=1 // pred_check_branch
      %15 = sbr.rel (0) target = $region5
    $region4: #{tpu_custom_call.1} parent=1 // pred_region
      _
    $region5: #{tpu_custom_call.1} parent=1 // pred_fallthru
      _
    // Predicated region
    $region6: #{tpu_custom_call.1} parent=1 // pred_check
      _
    $region7: #{tpu_custom_call.1} parent=1 // pred_check_branch
      %17 = sbr.rel (0) target = $region9
    $region8: #{tpu_custom_call.1} parent=1 // pred_region
      _
    $region9: #{tpu_custom_call.1} parent=1 // pred_fallthru
      _
    // Predicated region
    $region10: #{tpu_custom_call.1} parent=1 // pred_check
      _
    $region11: #{tpu_custom_call.1} parent=1 // pred_check_branch
      %19 = sbr.rel (0) target = $region13
    $region12: #{tpu_custom_call.1} parent=1 // pred_region
      _
    $region13: #{tpu_custom_call.1} parent=1 // pred_fallthru
      _
    // Predicated region
    $region14: #{tpu_custom_call.1} parent=1 // pred_check
      _
    $region15: #{tpu_custom_call.1} parent=1 // pred_check_branch
      %21 = sbr.rel (0) target = $region17
    $region16: #{tpu_custom_call.1} parent=1 // pred_region
      _
    $region17: #{tpu_custom_call.1} parent=1 // pred_fallthru
      _
    // Predicated region
    $region18: #{tpu_custom_call.1} parent=1 // pred_check
      _
    $region19: #{tpu_custom_call.1} parent=1 // pred_check_branch
      %23 = sbr.rel (0) target = $region21
    $region20: #{tpu_custom_call.1} parent=1 // pred_region
      _
    $region21: #{tpu_custom_call.1} parent=1 // pred_fallthru
      _
    // Predicated region
    $region22: #{tpu_custom_call.1} parent=1 // pred_check
      _
    $region23: #{tpu_custom_call.1} parent=1 // pred_check_branch
      %25 = sbr.rel (0) target = $region25
    $region24: #{tpu_custom_call.1} parent=1 // pred_region
      _
    $region25: #{tpu_custom_call.1} parent=1 // pred_fallthru
      _
    // Predicated region
    $region26: #{tpu_custom_call.1} parent=1 // pred_check
      _
    $region27: #{tpu_custom_call.1} parent=1 // pred_check_branch
      %27 = sbr.rel (0) target = $region29
    $region28: #{tpu_custom_call.1} parent=1 // pred_region
      _
    $region29: #{tpu_custom_call.1} parent=1 // pred_fallthru
      _
    %v29 = vld [vmem:[%s0] sm:$0xf]
    %v30 = vld [vmem:[%s0 + $0x4] sm:$0xf]
    %v31 = vld [vmem:[%s1] sm:$0xf]
    %v32 = vld [vmem:[%s1 + $0x4] sm:$0xf]
    %v33 = vld [vmem:[%s1 + $0x8] sm:$0xf]
    %v34 = vld [vmem:[%s1 + $0xc] sm:$0xf]
    %v35 = vld [vmem:[%s2] sm:$0xff]
    %v36 = vld [vmem:[%s2 + $0x8] sm:$0xff]
    %v37 = vld [vmem:[%s2 + $0x10] sm:$0xff]
    %v38 = vld [vmem:[%s2 + $0x18] sm:$0xff]
    %40 = vset.pattern.permute.xlu0 0
    %41 = vperm.xlu0 %40, %v35
    %v42 = vpop.permute.xlu0 %41
    %45 = vset.pattern.permute.xlu0 0
    %46 = vperm.xlu0 %45, %v36
    %v47 = vpop.permute.xlu0 %46
    %50 = vset.pattern.permute.xlu0 0
    %51 = vperm.xlu0 %50, %v37
    %v52 = vpop.permute.xlu0 %51
    %55 = vset.pattern.permute.xlu0 0
    %56 = vperm.xlu0 %55, %v38
    %v57 = vpop.permute.xlu0 %56
    %v63 = vunpack.c.l.b16 %v31
    %v64 = vunpack.c.l.b16 %v32
    %v65 = vunpack.c.l.b16 %v33
    %v66 = vunpack.c.l.b16 %v34
    %v67 = vpack.c.b16 %v64, %v63
    %v68 = vpack.c.b16 %v66, %v65
    %v71 = vunpack.c.l.b16 %v29
    %v72 = vunpack.c.l.b16 %v30
    %v73 = vpack.c.b16 %v72, %v71
    %vm75 = vcmask 130048
    %v77 = vsel %vm75, %v67, 0
    %v80 = vsel %vm75, %v68, 0
    %82 = vmatprep.subr.bf16.mxu0 0
    %83 = vmatpush1.bf16.msra.mxu0 %v73
    %84 = vmatprep.subr.bf16.mxu0 0
    %85 = vmatpush1.bf16.msra.mxu0 0
    %86 = vmatprep.subr.bf16.mxu0 0
    %87 = vmatpush1.bf16.msra.mxu0 0
    %88 = vmatprep.subr.bf16.mxu0 0
    %89 = vmatpush1.bf16.msra.mxu0 0
    %90 = vmatprep.subr.bf16.mxu0 0
    %91 = vmatpush1.bf16.msra.mxu0 0
    %92 = vmatprep.subr.bf16.mxu0 0
    %93 = vmatpush1.bf16.msra.mxu0 0
    %94 = vmatprep.subr.bf16.mxu0 0
    %95 = vmatpush1.bf16.msra.mxu0 0
    %96 = vmatprep.subr.bf16.mxu0 0
    %97 = vmatpush1.bf16.msra.mxu0 0
    %98 = vmatprep.subr.bf16.mxu0 0
    %99 = vmatpush1.bf16.msra.mxu0 0
    %100 = vmatprep.subr.bf16.mxu0 0
    %101 = vmatpush1.bf16.msra.mxu0 0
    %102 = vmatprep.subr.bf16.mxu0 0
    %103 = vmatpush1.bf16.msra.mxu0 0
    %104 = vmatprep.subr.bf16.mxu0 0
    %105 = vmatpush1.bf16.msra.mxu0 0
    %106 = vmatprep.subr.bf16.mxu0 0
    %107 = vmatpush1.bf16.msra.mxu0 0
    %108 = vmatprep.subr.bf16.mxu0 0
    %109 = vmatpush1.bf16.msra.mxu0 0
    %110 = vmatprep.subr.bf16.mxu0 0
    %111 = vmatpush1.bf16.msra.mxu0 0
    %112 = vmatprep.subr.bf16.mxu0 0
    %113 = vmatpush1.bf16.msra.mxu0 0
    %114 = vmatprep.mubr.bf16.mxu0 0
    %115 = vmatmul.mubr.bf16.gmra.mrb[0].mxu0 %v77
    %v116 = vpop.f32.mrb[0].mxu0
    %v117 = vadd.f32 %v42, %v116
    %v118 = vpop.f32.mrb[0].mxu0
    %v119 = vpop.f32.mrb[0].mxu0
    %v120 = vadd.f32 %v47, %v119
    %v121 = vpop.f32.mrb[0].mxu0
    %122 = vmatprep.mubr.bf16.mxu0 0
    %123 = vmatmul.mubr.bf16.gmra.mrb[0].mxu0 %v80
    %v124 = vpop.f32.mrb[0].mxu0
    %v125 = vadd.f32 %v52, %v124
    %v126 = vpop.f32.mrb[0].mxu0
    %v127 = vpop.f32.mrb[0].mxu0
    %v128 = vadd.f32 %v57, %v127
    %v129 = vpop.f32.mrb[0].mxu0
    %130 = vdwg.mxu0
    %v131 = vmax.f32 %v117, 0.0
    %v132 = vmax.f32 %v120, 0.0
    %v133 = vmax.f32 %v125, 0.0
    %v134 = vmax.f32 %v128, 0.0
    %v135 = vpack.c.bf16 %v132, %v131
    %v136 = vpack.c.bf16 %v134, %v133
    %v137 = vld [vmem:[%s3] sm:$0xf]
    %v138 = vld [vmem:[%s3 + $0x4] sm:$0xf]
    %v139 = vld [vmem:[%s3 + $0x8] sm:$0xf]
    %v140 = vld [vmem:[%s3 + $0xc] sm:$0xf]
    %v141 = vld [vmem:[%s4] sm:$0xff]
    %v142 = vld [vmem:[%s4 + $0x8] sm:$0xff]
    %v143 = vld [vmem:[%s4 + $0x10] sm:$0xff]
    %v144 = vld [vmem:[%s4 + $0x18] sm:$0xff]
    %146 = vset.pattern.permute.xlu0 0
    %147 = vperm.xlu0 %146, %v141
    %v148 = vpop.permute.xlu0 %147
    %151 = vset.pattern.permute.xlu0 0
    %152 = vperm.xlu0 %151, %v142
    %v153 = vpop.permute.xlu0 %152
    %156 = vset.pattern.permute.xlu0 0
    %157 = vperm.xlu0 %156, %v143
    %v158 = vpop.permute.xlu0 %157
    %161 = vset.pattern.permute.xlu0 0
    %162 = vperm.xlu0 %161, %v144
    %v163 = vpop.permute.xlu0 %162
    %v169 = vunpack.c.l.b16 %v137
    %v170 = vunpack.c.l.b16 %v138
    %v171 = vunpack.c.l.b16 %v139
    %v172 = vunpack.c.l.b16 %v140
    %v173 = vpack.c.b16 %v170, %v169
    %v174 = vpack.c.b16 %v172, %v171
    %vm175 = vcmask 261120
    %v177 = vsel %vm175, %v173, 0
    %v180 = vsel %vm175, %v174, 0
    %182 = vmatprep.subr.bf16.mxu0 0
    %183 = vmatpush1.bf16.msra.mxu0 %v135
    %184 = vmatprep.subr.bf16.mxu0 0
    %185 = vmatpush1.bf16.msra.mxu0 %v136
    %186 = vmatprep.subr.bf16.mxu0 0
    %187 = vmatpush1.bf16.msra.mxu0 0
    %188 = vmatprep.subr.bf16.mxu0 0
    %189 = vmatpush1.bf16.msra.mxu0 0
    %190 = vmatprep.subr.bf16.mxu0 0
    %191 = vmatpush1.bf16.msra.mxu0 0
    %192 = vmatprep.subr.bf16.mxu0 0
    %193 = vmatpush1.bf16.msra.mxu0 0
    %194 = vmatprep.subr.bf16.mxu0 0
    %195 = vmatpush1.bf16.msra.mxu0 0
    %196 = vmatprep.subr.bf16.mxu0 0
    %197 = vmatpush1.bf16.msra.mxu0 0
    %198 = vmatprep.subr.bf16.mxu0 0
    %199 = vmatpush1.bf16.msra.mxu0 0
    %200 = vmatprep.subr.bf16.mxu0 0
    %201 = vmatpush1.bf16.msra.mxu0 0
    %202 = vmatprep.subr.bf16.mxu0 0
    %203 = vmatpush1.bf16.msra.mxu0 0
    %204 = vmatprep.subr.bf16.mxu0 0
    %205 = vmatpush1.bf16.msra.mxu0 0
    %206 = vmatprep.subr.bf16.mxu0 0
    %207 = vmatpush1.bf16.msra.mxu0 0
    %208 = vmatprep.subr.bf16.mxu0 0
    %209 = vmatpush1.bf16.msra.mxu0 0
    %210 = vmatprep.subr.bf16.mxu0 0
    %211 = vmatpush1.bf16.msra.mxu0 0
    %212 = vmatprep.subr.bf16.mxu0 0
    %213 = vmatpush1.bf16.msra.mxu0 0
    %214 = vmatprep.mubr.bf16.mxu0 0
    %215 = vmatmul.mubr.bf16.gmra.mrb[0].mxu0 %v177
    %v216 = vpop.f32.mrb[0].mxu0
    %v217 = vadd.f32 %v148, %v216
    %v218 = vpop.f32.mrb[0].mxu0
    %v219 = vpop.f32.mrb[0].mxu0
    %v220 = vadd.f32 %v153, %v219
    %v221 = vpop.f32.mrb[0].mxu0
    %222 = vmatprep.mubr.bf16.mxu0 0
    %223 = vmatmul.mubr.bf16.gmra.mrb[0].mxu0 %v180
    %v224 = vpop.f32.mrb[0].mxu0
    %v225 = vadd.f32 %v158, %v224
    %v226 = vpop.f32.mrb[0].mxu0
    %v227 = vpop.f32.mrb[0].mxu0
    %v228 = vadd.f32 %v163, %v227
    %v229 = vpop.f32.mrb[0].mxu0
    %230 = vdwg.mxu0
    %v231 = vmax.f32 %v217, 0.0
    %v232 = vmax.f32 %v220, 0.0
    %v233 = vmax.f32 %v225, 0.0
    %v234 = vmax.f32 %v228, 0.0
    %v235 = vpack.c.bf16 %v232, %v231
    %v236 = vpack.c.bf16 %v234, %v233
    %v237 = vld [vmem:[%s5] sm:$0x1]
    %s238 = sld [smem:[#allocation2]]
    %v239 = vstv %s238
    %v241 = vsel %vm175, %v237, 0
    %243 = vmatprep.subr.bf16.mxu0 0
    %244 = vmatpush1.bf16.msra.mxu0 %v235
    %245 = vmatprep.subr.bf16.mxu0 0
    %246 = vmatpush1.bf16.msra.mxu0 %v236
    %247 = vmatprep.subr.bf16.mxu0 0
    %248 = vmatpush1.bf16.msra.mxu0 0
    %249 = vmatprep.subr.bf16.mxu0 0
    %250 = vmatpush1.bf16.msra.mxu0 0
    %251 = vmatprep.subr.bf16.mxu0 0
    %252 = vmatpush1.bf16.msra.mxu0 0
    %253 = vmatprep.subr.bf16.mxu0 0
    %254 = vmatpush1.bf16.msra.mxu0 0
    %255 = vmatprep.subr.bf16.mxu0 0
    %256 = vmatpush1.bf16.msra.mxu0 0
    %257 = vmatprep.subr.bf16.mxu0 0
    %258 = vmatpush1.bf16.msra.mxu0 0
    %259 = vmatprep.subr.bf16.mxu0 0
    %260 = vmatpush1.bf16.msra.mxu0 0
    %261 = vmatprep.subr.bf16.mxu0 0
    %262 = vmatpush1.bf16.msra.mxu0 0
    %263 = vmatprep.subr.bf16.mxu0 0
    %264 = vmatpush1.bf16.msra.mxu0 0
    %265 = vmatprep.subr.bf16.mxu0 0
    %266 = vmatpush1.bf16.msra.mxu0 0
    %267 = vmatprep.subr.bf16.mxu0 0
    %268 = vmatpush1.bf16.msra.mxu0 0
    %269 = vmatprep.subr.bf16.mxu0 0
    %270 = vmatpush1.bf16.msra.mxu0 0
    %271 = vmatprep.subr.bf16.mxu0 0
    %272 = vmatpush1.bf16.msra.mxu0 0
    %273 = vmatprep.subr.bf16.mxu0 0
    %274 = vmatpush1.bf16.msra.mxu0 0
    %275 = vmatprep.mubr.bf16.mxu0 0
    %276 = vmatmul.mubr.bf16.gmra.mrb[0].mxu0 %v241
    %v277 = vpop.f32.mrb[0].mxu0
    %v278 = vadd.f32 %v239, %v277
    %v279 = vpop.f32.mrb[0].mxu0
    %v280 = vpop.f32.mrb[0].mxu0
    %v281 = vpop.f32.mrb[0].mxu0
    %282 = vdwg.mxu0
    %v283 = vmax.f32 %v278, -30.0
    %v284 = vmin.f32 %v283, 30.0
    %v285 = vsub.f32 0.0, %v284
    %v286 = vmul.f32 %v285, 1.442695
    %v287 = vpow.pop %v286
    %v288 = vadd.f32 %v287, 1.0
    %v289 = vrcp.pop %v288
    %vm290 = vcmask 57344
    %291 = vst.msk [vmem:[#allocation3] sm:$0x1] %vm290, %v289
    // Predicated region
    $region30: #{tpu_custom_call.1} parent=1 // pred_check
      _
    $region31: #{tpu_custom_call.1} parent=1 // pred_check_branch
      %293 = sbr.rel (0) target = $region33
    $region32: #{tpu_custom_call.1} parent=1 // pred_region
      %s295 = ssub.s32 16, 16
      %296 = vsyncadd [#allocation4], %s295
      %s298 = sshll.u32 [#allocation3], 4
      %s299 = int_to_ptr.vmem [resolvable:$true] %s298
      %301 = dma.vmem_to_hbm [thread:$0]  %s299, 16, %s7, [#allocation4]
    $region33: #{tpu_custom_call.1} parent=1 // pred_fallthru
      _
    // Predicated region
    $region34: #{tpu_custom_call.1} parent=1 // pred_check
      _
    $region35: #{tpu_custom_call.1} parent=1 // pred_check_branch
      %303 = sbr.rel (0) target = $region37
    $region36: #{tpu_custom_call.1} parent=1 // pred_region
      %304 = dma.done [#allocation4], 16
    $region37: #{tpu_custom_call.1} parent=1 // pred_fallthru
      _
    %305 = vsyncpa [#allocation4], 1

</llo_original>
